<compile_context>
chip_gen: v5e
topology: v5e:2x2
jax: 0.10.0
libtpu: 0.0.40
codegen_flags: <defaults>
</compile_context>

<pallas_src>
import jax
import jax.numpy as jnp
from jax import lax
from jax.experimental import pallas as pl
from jax.experimental.pallas import tpu as pltpu

H1, H2 = 64, 32


def _round_up(n, m):
    return ((n + m - 1) // m) * m


def _vmem_capacity_bytes():
    try:
        return pltpu.get_tpu_info().vmem_capacity_bytes
    except Exception:
        return 128 * 1024 * 1024


def _bytes_per_row(in_f):
    # Conservative per-batch-row VMEM estimate:
    #   2 * 4*in_f    double-buffered f32 x tile
    #   + 2*in_f      in-kernel bf16 copy of x
    #   + 6*(H1+H2)   f32 + bf16 h1 / h2 intermediates
    #   + 2 * 4       double-buffered f32 output row
    return 10 * in_f + 6 * (H1 + H2) + 8


def _pick_batch_tile(batch, in_f, two_core):
    """Footprint-driven batch tile (multiple of 128 => lane-dense output)."""
    b128 = _round_up(max(batch, 1), 128)

    # Biggest tile whose streamed/intermediate footprint stays ~<= 24 MiB.
    vmem_budget = 24 * 1024 * 1024
    tb = (vmem_budget // _bytes_per_row(in_f)) // 128 * 128
    tb = max(128, min(tb, 32768, b128))

    # On 2-TensorCore chips (v7x) keep >= 2 grid steps so dimension_semantics
    # ("parallel",) can shard the batch across both cores.
    if two_core and b128 >= 2 * 128:
        tb = min(tb, _round_up(pl.cdiv(b128, 2), 128))

    # Prefer a tile that divides the 128-padded batch (avoids a pad pass over x)
    # as long as it stays within 2x of the budget tile.
    best_div, t = 128, 128
    while t <= tb:
        if b128 % t == 0:
            best_div = t
        t += 128
    if best_div * 2 >= tb:
        tb = best_div
    return tb


def regressor_kernel(x_ref, w1_ref, b1_ref, w2_ref, b2_ref, w3_ref, b3_ref, o_ref):
    # x arrives as f32 straight from HBM; cast to bf16 on the VPU (free relative
    # to the DMA) right before the MXU dot, so HBM only sees 4 B/elem of x.
    xb = x_ref[...].astype(jnp.bfloat16)

    # Layer 1: bf16 MXU matmul, f32 accumulation; bias + ReLU on the VPU in f32.
    h1 = jnp.dot(xb, w1_ref[...], preferred_element_type=jnp.float32)
    h1 = jnp.maximum(h1 + b1_ref[...], 0.0)

    # Layer 2.
    h2 = jnp.dot(h1.astype(jnp.bfloat16), w2_ref[...],
                 preferred_element_type=jnp.float32)
    h2 = jnp.maximum(h2 + b2_ref[...], 0.0)

    # Layer 3 (32 -> 1), transposed: (1, H2) . (TB, H2)^T -> (1, TB) so the
    # output store is lane-dense (batch on the lane axis).
    out_t = lax.dot_general(
        w3_ref[...],                      # (1, H2)  bf16
        h2.astype(jnp.bfloat16),          # (TB, H2) bf16
        dimension_numbers=(((1,), (1,)), ((), ())),
        preferred_element_type=jnp.float32,
    )                                     # (1, TB) f32
    out_t = out_t + b3_ref[0, 0]          # scalar bias from SMEM
    o_ref[...] = out_t.reshape(o_ref.shape).astype(o_ref.dtype)


def regressor_net(x, params, *, batch_tile=None):
    """Fused MLP forward. x: [B, input_size] -> [B, 1] float32."""
    w1, b1, w2, b2, w3, b3 = params
    B, in_f = x.shape

    vmem_cap = _vmem_capacity_bytes()
    two_core = vmem_cap <= 64 * 1024 * 1024       # v7x proxy: 64 MiB VMEM / TC

    if batch_tile is not None:
        tb = max(128, _round_up(int(batch_tile), 128))   # keep output lane-dense
    else:
        tb = _pick_batch_tile(B, in_f, two_core)

    nt = pl.cdiv(B, tb)
    b_pad = nt * tb

    # x stays f32: the kernel reads it exactly once; the pad pass only triggers
    # for a < 1-tile tail (tile selection prefers divisors of the padded batch).
    x32 = x.astype(jnp.float32)
    if b_pad != B:
        x32 = jnp.pad(x32, ((0, b_pad - B), (0, 0)))

    # Tiny weights/biases: bf16 matmul operands, f32 biases; VMEM-resident across
    # all grid steps via constant index_maps.
    w1b = w1.astype(jnp.bfloat16)
    w2b = w2.astype(jnp.bfloat16)
    w3b = w3.reshape(1, H2).astype(jnp.bfloat16)     # (32, 1) -> (1, 32)
    b1f = b1.reshape(1, H1).astype(jnp.float32)
    b2f = b2.reshape(1, H2).astype(jnp.float32)
    b3f = b3.reshape(1, 1).astype(jnp.float32)

    const = lambda shape: pl.BlockSpec(shape, lambda i: (0,) * len(shape))

    # VMEM limit tied to the tile footprint; keep headroom below physical VMEM.
    footprint = tb * _bytes_per_row(in_f) + 64 * 1024
    vmem_ceiling = (48 if two_core else 100) * 1024 * 1024
    vmem_limit = int(min(vmem_ceiling, max(32 * 1024 * 1024, footprint * 3 // 2)))

    cost = pl.CostEstimate(
        flops=2 * b_pad * (in_f * H1 + H1 * H2 + H2),
        transcendentals=0,
        bytes_accessed=int(b_pad * (in_f * 4 + 4)
                           + (in_f * H1 + H1 * H2 + H2) * 2 + (H1 + H2 + 1) * 4),
    )

    out3d = pl.pallas_call(
        regressor_kernel,
        out_shape=jax.ShapeDtypeStruct((nt, 1, tb), jnp.float32),
        grid=(nt,),
        in_specs=[
            pl.BlockSpec((tb, in_f), lambda i: (i, 0)),         # streamed f32 x
            const((in_f, H1)), const((1, H1)),                  # resident weights
            const((H1, H2)), const((1, H2)),
            const((1, H2)),
            pl.BlockSpec(memory_space=pltpu.MemorySpace.SMEM),  # b3 scalar
        ],
        out_specs=pl.BlockSpec((1, 1, tb), lambda i: (i, 0, 0)),  # lane-dense block
        compiler_params=pltpu.CompilerParams(
            dimension_semantics=("parallel",),                  # both TCs on v7x
            vmem_limit_bytes=vmem_limit,
        ),
        cost_estimate=cost,
    )(x32, w1b, b1f, w2b, b2f, w3b, b3f)

    # (nt, 1, tb) -> (nt*tb, 1) -> drop the batch padding.
    return out3d.reshape(b_pad, 1)[:B]


def init_params(key, input_size):
    """Deterministic init mimicking nn.Linear's U(-1/sqrt(fan_in), 1/sqrt(fan_in))."""
    def linear(key, fan_in, fan_out):
        kw, kb = jax.random.split(key)
        bound = 1.0 / jnp.sqrt(jnp.float32(fan_in))
        # stored as [in, out] so the kernel does x @ W
        w = jax.random.uniform(kw, (fan_in, fan_out), jnp.float32, -bound, bound)
        b = jax.random.uniform(kb, (1, fan_out), jnp.float32, -bound, bound)
        return w, b

    k1, k2, k3 = jax.random.split(key, 3)
    w1, b1 = linear(k1, input_size, H1)
    w2, b2 = linear(k2, H1, H2)
    w3, b3 = linear(k3, H2, 1)
    return (w1, b1, w2, b2, w3, b3)


def reference_forward(x, params):
    w1, b1, w2, b2, w3, b3 = params
    h1 = jnp.maximum(x @ w1 + b1, 0.0)
    h2 = jnp.maximum(h1 @ w2 + b2, 0.0)
    return h2 @ w3 + b3


if __name__ == "__main__":
    key = jax.random.PRNGKey(0)
    k_params, k_x = jax.random.split(key)

    batch, input_size = 8, 16
    params = init_params(k_params, input_size)
    x = jax.random.normal(k_x, (batch, input_size), jnp.float32)

    out = jax.block_until_ready(regressor_net(x, params))

    ref = reference_forward(x, params)
    assert out.shape == (batch, 1)
    assert out.dtype == jnp.float32
    # bf16 MXU operands with f32 accumulation -> small numeric drift vs the f32 ref.
    assert jnp.allclose(out, ref, atol=5e-2, rtol=5e-2), "mismatch vs reference"

    print("KERNEL_OK")
</pallas_src>

<mosaic_0001>
module attributes {stable_mosaic.version = 11 : i64} {
  func.func @regressor_kernel(%arg0: i32, %arg1: memref<128x16xf32, #tpu.memory_space<vmem>>, %arg2: memref<16x64xbf16, #tpu.memory_space<vmem>>, %arg3: memref<1x64xf32, #tpu.memory_space<vmem>>, %arg4: memref<64x32xbf16, #tpu.memory_space<vmem>>, %arg5: memref<1x32xf32, #tpu.memory_space<vmem>>, %arg6: memref<1x32xbf16, #tpu.memory_space<vmem>>, %arg7: memref<1x1xf32, #tpu.memory_space<smem>>, %arg8: memref<1x1x128xf32, #tpu.memory_space<vmem>>) attributes {dimension_semantics = [#tpu.dimension_semantics<parallel>], iteration_bounds = array<i64: 1>, scalar_prefetch = 0 : i64, scratch_operands = 0 : i64, tpu.core_type = #tpu.core_type<tc>, window_params = [{transform_indices = @transform_0, window_bounds = array<i64: 128, 16>}, {pipeline_mode = #tpu.pipeline_mode<synchronous>, transform_indices = @transform_1, window_bounds = array<i64: 16, 64>}, {pipeline_mode = #tpu.pipeline_mode<synchronous>, transform_indices = @transform_2, window_bounds = array<i64: 1, 64>}, {pipeline_mode = #tpu.pipeline_mode<synchronous>, transform_indices = @transform_3, window_bounds = array<i64: 64, 32>}, {pipeline_mode = #tpu.pipeline_mode<synchronous>, transform_indices = @transform_4, window_bounds = array<i64: 1, 32>}, {pipeline_mode = #tpu.pipeline_mode<synchronous>, transform_indices = @transform_5, window_bounds = array<i64: 1, 32>}, {transform_indices = @transform_6, window_bounds = array<i64: 1, 1>}, {transform_indices = @transform_7, window_bounds = array<i64: 1, 1, 128>}]} {
    %c0 = arith.constant 0 : index
    %c0_0 = arith.constant 0 : index
    %0 = vector.load %arg1[%c0, %c0_0] : memref<128x16xf32, #tpu.memory_space<vmem>>, vector<128x16xf32>
    %1 = arith.truncf %0 : vector<128x16xf32> to vector<128x16xbf16>
    %c0_1 = arith.constant 0 : index
    %c0_2 = arith.constant 0 : index
    %2 = vector.load %arg2[%c0_1, %c0_2] : memref<16x64xbf16, #tpu.memory_space<vmem>>, vector<16x64xbf16>
    %cst = arith.constant dense<0.000000e+00> : vector<128x64xf32>
    %3 = tpu.matmul %1, %2, %cst {dimension_numbers = #tpu.dot_dimension_numbers<[1], [0], [0], [1], [0, 0, 1, 1], [], []>} : vector<128x16xbf16>, vector<16x64xbf16>, vector<128x64xf32> -> vector<128x64xf32>
    %c0_3 = arith.constant 0 : index
    %c0_4 = arith.constant 0 : index
    %4 = vector.load %arg3[%c0_3, %c0_4] : memref<1x64xf32, #tpu.memory_space<vmem>>, vector<1x64xf32>
    %5 = vector.broadcast %4 : vector<1x64xf32> to vector<128x64xf32>
    %6 = arith.addf %3, %5 : vector<128x64xf32>
    %cst_5 = arith.constant 0.000000e+00 : f32
    %7 = vector.broadcast %cst_5 : f32 to vector<128x64xf32>
    %8 = arith.maximumf %6, %7 : vector<128x64xf32>
    %9 = arith.truncf %8 : vector<128x64xf32> to vector<128x64xbf16>
    %c0_6 = arith.constant 0 : index
    %c0_7 = arith.constant 0 : index
    %10 = vector.load %arg4[%c0_6, %c0_7] : memref<64x32xbf16, #tpu.memory_space<vmem>>, vector<64x32xbf16>
    %cst_8 = arith.constant dense<0.000000e+00> : vector<128x32xf32>
    %11 = tpu.matmul %9, %10, %cst_8 {dimension_numbers = #tpu.dot_dimension_numbers<[1], [0], [0], [1], [0, 0, 1, 1], [], []>} : vector<128x64xbf16>, vector<64x32xbf16>, vector<128x32xf32> -> vector<128x32xf32>
    %c0_9 = arith.constant 0 : index
    %c0_10 = arith.constant 0 : index
    %12 = vector.load %arg5[%c0_9, %c0_10] : memref<1x32xf32, #tpu.memory_space<vmem>>, vector<1x32xf32>
    %13 = vector.broadcast %12 : vector<1x32xf32> to vector<128x32xf32>
    %14 = arith.addf %11, %13 : vector<128x32xf32>
    %cst_11 = arith.constant 0.000000e+00 : f32
    %15 = vector.broadcast %cst_11 : f32 to vector<128x32xf32>
    %16 = arith.maximumf %14, %15 : vector<128x32xf32>
    %c0_12 = arith.constant 0 : index
    %c0_13 = arith.constant 0 : index
    %17 = vector.load %arg6[%c0_12, %c0_13] : memref<1x32xbf16, #tpu.memory_space<vmem>>, vector<1x32xbf16>
    %18 = arith.truncf %16 : vector<128x32xf32> to vector<128x32xbf16>
    %cst_14 = arith.constant dense<0.000000e+00> : vector<1x128xf32>
    %19 = tpu.matmul %17, %18, %cst_14 {dimension_numbers = #tpu.dot_dimension_numbers<[1], [1], [0], [0], [0, 0, 1, 0], [], []>} : vector<1x32xbf16>, vector<128x32xbf16>, vector<1x128xf32> -> vector<1x128xf32>
    %c0_15 = arith.constant 0 : index
    %c0_16 = arith.constant 0 : index
    %20 = memref.load %arg7[%c0_15, %c0_16] : memref<1x1xf32, #tpu.memory_space<smem>>
    %21 = vector.broadcast %20 : f32 to vector<1x128xf32>
    %22 = arith.addf %19, %21 : vector<1x128xf32>
    %23 = vector.shape_cast %22 : vector<1x128xf32> to vector<1x1x128xf32>
    %c0_17 = arith.constant 0 : index
    %c0_18 = arith.constant 0 : index
    %c0_19 = arith.constant 0 : index
    %24 = vector.load %arg8[%c0_17, %c0_18, %c0_19] : memref<1x1x128xf32, #tpu.memory_space<vmem>>, vector<1x1x128xf32>
    tpu.vector_store %arg8[%c0_17, %c0_18, %c0_19], %23 {strides = array<i32>} : memref<1x1x128xf32, #tpu.memory_space<vmem>>, vector<1x1x128xf32>,
    return
  }
  func.func @transform_0(%arg0: i32) -> (i32, i32) {
    %c0_i32 = arith.constant 0 : i32
    %c0_i32_0 = arith.constant 0 : i32
    return %arg0, %c0_i32 : i32, i32
  }
  func.func @transform_1(%arg0: i32) -> (i32, i32) {
    %c0_i32 = arith.constant 0 : i32
    %c0_i32_0 = arith.constant 0 : i32
    %c0_i32_1 = arith.constant 0 : i32
    return %c0_i32, %c0_i32_0 : i32, i32
  }
  func.func @transform_2(%arg0: i32) -> (i32, i32) {
    %c0_i32 = arith.constant 0 : i32
    %c0_i32_0 = arith.constant 0 : i32
    %c0_i32_1 = arith.constant 0 : i32
    return %c0_i32, %c0_i32_0 : i32, i32
  }
  func.func @transform_3(%arg0: i32) -> (i32, i32) {
    %c0_i32 = arith.constant 0 : i32
    %c0_i32_0 = arith.constant 0 : i32
    %c0_i32_1 = arith.constant 0 : i32
    return %c0_i32, %c0_i32_0 : i32, i32
  }
  func.func @transform_4(%arg0: i32) -> (i32, i32) {
    %c0_i32 = arith.constant 0 : i32
    %c0_i32_0 = arith.constant 0 : i32
    %c0_i32_1 = arith.constant 0 : i32
    return %c0_i32, %c0_i32_0 : i32, i32
  }
  func.func @transform_5(%arg0: i32) -> (i32, i32) {
    %c0_i32 = arith.constant 0 : i32
    %c0_i32_0 = arith.constant 0 : i32
    %c0_i32_1 = arith.constant 0 : i32
    return %c0_i32, %c0_i32_0 : i32, i32
  }
  func.func @transform_6(%arg0: i32) -> (i32, i32) {
    %c0_i32 = arith.constant 0 : i32
    %c0_i32_0 = arith.constant 0 : i32
    %c0_i32_1 = arith.constant 0 : i32
    return %c0_i32, %c0_i32_0 : i32, i32
  }
  func.func @transform_7(%arg0: i32) -> (i32, i32, i32) {
    %c0_i32 = arith.constant 0 : i32
    %c0_i32_0 = arith.constant 0 : i32
    %c0_i32_1 = arith.constant 0 : i32
    return %arg0, %c0_i32, %c0_i32_0 : i32, i32, i32
  }
}

</mosaic_0001>

<llo_original>
// kernel: tpu_custom_call.1
$region0: #{tpu_custom_call.1}
  #allocation0 [shape = 'u32[]', space=smem, size = 0x4, offset = 0x4, fixed_abs, tag = 'smem constant byte address 0x4 - core index']
  #allocation1 [shape = 'u32[72,128]{1,0:T(1,128)}', space=vmem, size = 0x9000, scoped, tag = 'internal scratch']
  #allocation2 [shape = 'f32[1,1]{1,0:T(1,128)S(6)}', space=smem, size = 0x200, scoped, tag = 'scoped memory for tpu_custom_call.1']
  %s0 = inlined_call_operand.vmem [shape: f32[128,16], index: 0, kind: input, shape index: {}]
  %s1 = inlined_call_operand.vmem [shape: bf16[16,64], index: 1, kind: input, shape index: {}]
  %s2 = inlined_call_operand.vmem [shape: f32[1,64], index: 2, kind: input, shape index: {}]
  %s3 = inlined_call_operand.vmem [shape: bf16[64,32], index: 3, kind: input, shape index: {}]
  %s4 = inlined_call_operand.vmem [shape: f32[1,32], index: 4, kind: input, shape index: {}]
  %s5 = inlined_call_operand.vmem [shape: bf16[1,32], index: 5, kind: input, shape index: {}]
  %s6 = inlined_call_operand.<no memory space> [shape: f32[1,1], index: 6, kind: input, shape index: {}]
  %s7 = inlined_call_operand.hbm [shape: f32[1,1,128], index: 7, kind: output, shape index: {}]
  %s8 = sld [smem:[#allocation0]]
  $region38: #{tpu_custom_call.1} parent=0
    _
  %s10 = ssub.s32 1, %s8
  %s11 = scalar_select 0, %s10, %s8
  %12 = sst [smem:[#allocation2]] %s6
  $region1: #{tpu_custom_call.1} parent=0
    #allocation3 [shape = 'u8[512]{0}', space=vmem, size = 0x400, scoped, tag = 'output window, operand 0, single buffered']
    #allocation4 [shape = 's32[1]{0}', space=sflag, size = 0x4, scoped, tag = 'scoped memory for tpu_custom_call.1']
    %13 = vsyncpa [#allocation4], 0
    // Predicated region
    $region2: #{tpu_custom_call.1} parent=1 // pred_check
      _
    $region3: #{tpu_custom_call.1} parent=1 // pred_check_branch
      %15 = sbr.rel (0) target = $region5
    $region4: #{tpu_custom_call.1} parent=1 // pred_region
      _
    $region5: #{tpu_custom_call.1} parent=1 // pred_fallthru
      _
    // Predicated region
    $region6: #{tpu_custom_call.1} parent=1 // pred_check
      _
    $region7: #{tpu_custom_call.1} parent=1 // pred_check_branch
      %17 = sbr.rel (0) target = $region9
    $region8: #{tpu_custom_call.1} parent=1 // pred_region
      _
    $region9: #{tpu_custom_call.1} parent=1 // pred_fallthru
      _
    // Predicated region
    $region10: #{tpu_custom_call.1} parent=1 // pred_check
      _
    $region11: #{tpu_custom_call.1} parent=1 // pred_check_branch
      %19 = sbr.rel (0) target = $region13
    $region12: #{tpu_custom_call.1} parent=1 // pred_region
      _
    $region13: #{tpu_custom_call.1} parent=1 // pred_fallthru
      _
    // Predicated region
    $region14: #{tpu_custom_call.1} parent=1 // pred_check
      _
    $region15: #{tpu_custom_call.1} parent=1 // pred_check_branch
      %21 = sbr.rel (0) target = $region17
    $region16: #{tpu_custom_call.1} parent=1 // pred_region
      _
    $region17: #{tpu_custom_call.1} parent=1 // pred_fallthru
      _
    // Predicated region
    $region18: #{tpu_custom_call.1} parent=1 // pred_check
      _
    $region19: #{tpu_custom_call.1} parent=1 // pred_check_branch
      %23 = sbr.rel (0) target = $region21
    $region20: #{tpu_custom_call.1} parent=1 // pred_region
      _
    $region21: #{tpu_custom_call.1} parent=1 // pred_fallthru
      _
    // Predicated region
    $region22: #{tpu_custom_call.1} parent=1 // pred_check
      _
    $region23: #{tpu_custom_call.1} parent=1 // pred_check_branch
      %25 = sbr.rel (0) target = $region25
    $region24: #{tpu_custom_call.1} parent=1 // pred_region
      _
    $region25: #{tpu_custom_call.1} parent=1 // pred_fallthru
      _
    // Predicated region
    $region26: #{tpu_custom_call.1} parent=1 // pred_check
      _
    $region27: #{tpu_custom_call.1} parent=1 // pred_check_branch
      %27 = sbr.rel (0) target = $region29
    $region28: #{tpu_custom_call.1} parent=1 // pred_region
      _
    $region29: #{tpu_custom_call.1} parent=1 // pred_fallthru
      _
    %v29 = vld [vmem:[%s0] sm:$0xff]
    %v30 = vld [vmem:[%s0 + $0x8] sm:$0xff]
    %v31 = vld [vmem:[%s0 + $0x10] sm:$0xff]
    %v32 = vld [vmem:[%s0 + $0x18] sm:$0xff]
    %v33 = vld [vmem:[%s0 + $0x20] sm:$0xff]
    %v34 = vld [vmem:[%s0 + $0x28] sm:$0xff]
    %v35 = vld [vmem:[%s0 + $0x30] sm:$0xff]
    %v36 = vld [vmem:[%s0 + $0x38] sm:$0xff]
    %v37 = vld [vmem:[%s0 + $0x40] sm:$0xff]
    %v38 = vld [vmem:[%s0 + $0x48] sm:$0xff]
    %v39 = vld [vmem:[%s0 + $0x50] sm:$0xff]
    %v40 = vld [vmem:[%s0 + $0x58] sm:$0xff]
    %v41 = vld [vmem:[%s0 + $0x60] sm:$0xff]
    %v42 = vld [vmem:[%s0 + $0x68] sm:$0xff]
    %v43 = vld [vmem:[%s0 + $0x70] sm:$0xff]
    %v44 = vld [vmem:[%s0 + $0x78] sm:$0xff]
    %v45 = vpack.c.bf16 %v30, %v29
    %v46 = vpack.c.bf16 %v32, %v31
    %v47 = vpack.c.bf16 %v34, %v33
    %v48 = vpack.c.bf16 %v36, %v35
    %v49 = vpack.c.bf16 %v38, %v37
    %v50 = vpack.c.bf16 %v40, %v39
    %v51 = vpack.c.bf16 %v42, %v41
    %v52 = vpack.c.bf16 %v44, %v43
    %v53 = vld [vmem:[%s1] sm:$0xf]
    %v54 = vld [vmem:[%s1 + $0x4] sm:$0xf]
    %v55 = vld [vmem:[%s2] sm:$0x1]
    %v57 = vperm.slane %v55, 0
    %v61 = vunpack.c.l.b16 %v53
    %v62 = vunpack.c.l.b16 %v54
    %v63 = vpack.c.b16 %v62, %v61
    %vm65 = vcmask 130048
    %v67 = vsel %vm65, %v45, 0
    %v70 = vsel %vm65, %v46, 0
    %v73 = vsel %vm65, %v47, 0
    %v76 = vsel %vm65, %v48, 0
    %v79 = vsel %vm65, %v49, 0
    %v82 = vsel %vm65, %v50, 0
    %v85 = vsel %vm65, %v51, 0
    %v88 = vsel %vm65, %v52, 0
    %90 = vmatpush.bf16.msra.mxu0 0
    %91 = vmatpush.bf16.msra.mxu0 0
    %92 = vmatpush.bf16.msra.mxu0 0
    %93 = vmatpush.bf16.msra.mxu0 0
    %94 = vmatpush.bf16.msra.mxu0 0
    %95 = vmatpush.bf16.msra.mxu0 0
    %96 = vmatpush.bf16.msra.mxu0 0
    %97 = vmatpush.bf16.msra.mxu0 %v63
    %98 = vmatmul.bf16.gmra.mxu0 %v67
    %v99 = vpop.f32.mrf.mxu0
    %v100 = vadd.f32 %v57, %v99
    %v101 = vpop.f32.mrf.mxu0
    %v102 = vadd.f32 %v57, %v101
    %103 = vmatmul.bf16.gmra.mxu0 %v70
    %v104 = vpop.f32.mrf.mxu0
    %v105 = vadd.f32 %v57, %v104
    %v106 = vpop.f32.mrf.mxu0
    %v107 = vadd.f32 %v57, %v106
    %108 = vmatmul.bf16.gmra.mxu0 %v73
    %v109 = vpop.f32.mrf.mxu0
    %v110 = vadd.f32 %v57, %v109
    %v111 = vpop.f32.mrf.mxu0
    %v112 = vadd.f32 %v57, %v111
    %113 = vmatmul.bf16.gmra.mxu0 %v76
    %v114 = vpop.f32.mrf.mxu0
    %v115 = vadd.f32 %v57, %v114
    %v116 = vpop.f32.mrf.mxu0
    %v117 = vadd.f32 %v57, %v116
    %118 = vmatmul.bf16.gmra.mxu0 %v79
    %v119 = vpop.f32.mrf.mxu0
    %v120 = vadd.f32 %v57, %v119
    %v121 = vpop.f32.mrf.mxu0
    %v122 = vadd.f32 %v57, %v121
    %123 = vmatmul.bf16.gmra.mxu0 %v82
    %v124 = vpop.f32.mrf.mxu0
    %v125 = vadd.f32 %v57, %v124
    %v126 = vpop.f32.mrf.mxu0
    %v127 = vadd.f32 %v57, %v126
    %128 = vmatmul.bf16.gmra.mxu0 %v85
    %v129 = vpop.f32.mrf.mxu0
    %v130 = vadd.f32 %v57, %v129
    %v131 = vpop.f32.mrf.mxu0
    %v132 = vadd.f32 %v57, %v131
    %133 = vmatmul.bf16.gmra.mxu0 %v88
    %v134 = vpop.f32.mrf.mxu0
    %v135 = vadd.f32 %v57, %v134
    %v136 = vpop.f32.mrf.mxu0
    %v137 = vadd.f32 %v57, %v136
    %138 = vdwg.mxu0
    %v139 = vmax.f32 %v100, 0.0
    %v140 = vmax.f32 %v102, 0.0
    %v141 = vmax.f32 %v105, 0.0
    %v142 = vmax.f32 %v107, 0.0
    %v143 = vmax.f32 %v110, 0.0
    %v144 = vmax.f32 %v112, 0.0
    %v145 = vmax.f32 %v115, 0.0
    %v146 = vmax.f32 %v117, 0.0
    %v147 = vmax.f32 %v120, 0.0
    %v148 = vmax.f32 %v122, 0.0
    %v149 = vmax.f32 %v125, 0.0
    %v150 = vmax.f32 %v127, 0.0
    %v151 = vmax.f32 %v130, 0.0
    %v152 = vmax.f32 %v132, 0.0
    %v153 = vmax.f32 %v135, 0.0
    %v154 = vmax.f32 %v137, 0.0
    %v155 = vpack.c.bf16 %v140, %v139
    %v156 = vpack.c.bf16 %v142, %v141
    %v157 = vpack.c.bf16 %v144, %v143
    %v158 = vpack.c.bf16 %v146, %v145
    %v159 = vpack.c.bf16 %v148, %v147
    %v160 = vpack.c.bf16 %v150, %v149
    %v161 = vpack.c.bf16 %v152, %v151
    %v162 = vpack.c.bf16 %v154, %v153
    %v163 = vld [vmem:[%s3] sm:$0xf]
    %v164 = vld [vmem:[%s3 + $0x4] sm:$0xf]
    %v165 = vld [vmem:[%s3 + $0x8] sm:$0xf]
    %v166 = vld [vmem:[%s3 + $0xc] sm:$0xf]
    %v167 = vld [vmem:[%s3 + $0x10] sm:$0xf]
    %v168 = vld [vmem:[%s3 + $0x14] sm:$0xf]
    %v169 = vld [vmem:[%s3 + $0x18] sm:$0xf]
    %v170 = vld [vmem:[%s3 + $0x1c] sm:$0xf]
    %v171 = vld [vmem:[%s4] sm:$0x1]
    %v173 = vperm.slane %v171, 0
    %v183 = vunpack.c.l.b16 %v163
    %v184 = vunpack.c.l.b16 %v164
    %v185 = vunpack.c.l.b16 %v165
    %v186 = vunpack.c.l.b16 %v166
    %v187 = vunpack.c.l.b16 %v167
    %v188 = vunpack.c.l.b16 %v168
    %v189 = vunpack.c.l.b16 %v169
    %v190 = vunpack.c.l.b16 %v170
    %v191 = vpack.c.b16 %v184, %v183
    %v192 = vpack.c.b16 %v186, %v185
    %v193 = vpack.c.b16 %v188, %v187
    %v194 = vpack.c.b16 %v190, %v189
    %vm199 = vcmask 523264
    %v201 = vsel %vm199, %v155, 0
    %v204 = vsel %vm199, %v156, 0
    %v207 = vsel %vm199, %v157, 0
    %v210 = vsel %vm199, %v158, 0
    %v213 = vsel %vm199, %v159, 0
    %v216 = vsel %vm199, %v160, 0
    %v219 = vsel %vm199, %v161, 0
    %v222 = vsel %vm199, %v162, 0
    %224 = vmatpush.bf16.msra.mxu0 0
    %225 = vmatpush.bf16.msra.mxu0 0
    %226 = vmatpush.bf16.msra.mxu0 0
    %227 = vmatpush.bf16.msra.mxu0 0
    %228 = vmatpush.bf16.msra.mxu0 %v194
    %229 = vmatpush.bf16.msra.mxu0 %v193
    %230 = vmatpush.bf16.msra.mxu0 %v192
    %231 = vmatpush.bf16.msra.mxu0 %v191
    %232 = vmatmul.bf16.gmra.mxu0 %v201
    %v233 = vpop.f32.mrf.mxu0
    %v234 = vadd.f32 %v173, %v233
    %v235 = vpop.f32.mrf.mxu0
    %v236 = vadd.f32 %v173, %v235
    %237 = vmatmul.bf16.gmra.mxu0 %v204
    %v238 = vpop.f32.mrf.mxu0
    %v239 = vadd.f32 %v173, %v238
    %v240 = vpop.f32.mrf.mxu0
    %v241 = vadd.f32 %v173, %v240
    %242 = vmatmul.bf16.gmra.mxu0 %v207
    %v243 = vpop.f32.mrf.mxu0
    %v244 = vadd.f32 %v173, %v243
    %v245 = vpop.f32.mrf.mxu0
    %v246 = vadd.f32 %v173, %v245
    %247 = vmatmul.bf16.gmra.mxu0 %v210
    %v248 = vpop.f32.mrf.mxu0
    %v249 = vadd.f32 %v173, %v248
    %v250 = vpop.f32.mrf.mxu0
    %v251 = vadd.f32 %v173, %v250
    %252 = vmatmul.bf16.gmra.mxu0 %v213
    %v253 = vpop.f32.mrf.mxu0
    %v254 = vadd.f32 %v173, %v253
    %v255 = vpop.f32.mrf.mxu0
    %v256 = vadd.f32 %v173, %v255
    %257 = vmatmul.bf16.gmra.mxu0 %v216
    %v258 = vpop.f32.mrf.mxu0
    %v259 = vadd.f32 %v173, %v258
    %v260 = vpop.f32.mrf.mxu0
    %v261 = vadd.f32 %v173, %v260
    %262 = vmatmul.bf16.gmra.mxu0 %v219
    %v263 = vpop.f32.mrf.mxu0
    %v264 = vadd.f32 %v173, %v263
    %v265 = vpop.f32.mrf.mxu0
    %v266 = vadd.f32 %v173, %v265
    %267 = vmatmul.bf16.gmra.mxu0 %v222
    %v268 = vpop.f32.mrf.mxu0
    %v269 = vadd.f32 %v173, %v268
    %v270 = vpop.f32.mrf.mxu0
    %v271 = vadd.f32 %v173, %v270
    %272 = vdwg.mxu0
    %v273 = vmax.f32 %v234, 0.0
    %v274 = vmax.f32 %v236, 0.0
    %v275 = vmax.f32 %v239, 0.0
    %v276 = vmax.f32 %v241, 0.0
    %v277 = vmax.f32 %v244, 0.0
    %v278 = vmax.f32 %v246, 0.0
    %v279 = vmax.f32 %v249, 0.0
    %v280 = vmax.f32 %v251, 0.0
    %v281 = vmax.f32 %v254, 0.0
    %v282 = vmax.f32 %v256, 0.0
    %v283 = vmax.f32 %v259, 0.0
    %v284 = vmax.f32 %v261, 0.0
    %v285 = vmax.f32 %v264, 0.0
    %v286 = vmax.f32 %v266, 0.0
    %v287 = vmax.f32 %v269, 0.0
    %v288 = vmax.f32 %v271, 0.0
    %v289 = vld [vmem:[%s5] sm:$0x1]
    %v290 = vpack.c.bf16 %v274, %v273
    %v291 = vpack.c.bf16 %v276, %v275
    %v292 = vpack.c.bf16 %v278, %v277
    %v293 = vpack.c.bf16 %v280, %v279
    %v294 = vpack.c.bf16 %v282, %v281
    %v295 = vpack.c.bf16 %v284, %v283
    %v296 = vpack.c.bf16 %v286, %v285
    %v297 = vpack.c.bf16 %v288, %v287
    %s298 = sld [smem:[#allocation2]]
    %v299 = vstv %s298
    %vm300 = vcmask 261120
    %v302 = vsel %vm300, %v289, 0
    %v305 = vsel %vm300, %v290, 0
    %v308 = vsel %vm300, %v291, 0
    %v311 = vsel %vm300, %v292, 0
    %v314 = vsel %vm300, %v293, 0
    %v317 = vsel %vm300, %v294, 0
    %v320 = vsel %vm300, %v295, 0
    %v323 = vsel %vm300, %v296, 0
    %v326 = vsel %vm300, %v297, 0
    %328 = vmatpush.bf16.xpose.msra.mxu0 %v326
    %329 = vmatpush.bf16.xpose.msra.mxu0 %v323
    %330 = vmatpush.bf16.xpose.msra.mxu0 %v320
    %331 = vmatpush.bf16.xpose.msra.mxu0 %v317
    %332 = vmatpush.bf16.xpose.msra.mxu0 %v314
    %333 = vmatpush.bf16.xpose.msra.mxu0 %v311
    %334 = vmatpush.bf16.xpose.msra.mxu0 %v308
    %335 = vmatpush.bf16.xpose.msra.mxu0 %v305
    %336 = vmatmul.bf16.gmra.mxu0 %v302
    %v337 = vpop.f32.mrf.mxu0
    %v338 = vadd.f32 %v299, %v337
    %v339 = vpop.f32.mrf.mxu0
    %340 = vdwg.mxu0
    %341 = vst [vmem:[#allocation3] sm:$0x1] %v338
    // Predicated region
    $region30: #{tpu_custom_call.1} parent=1 // pred_check
      _
    $region31: #{tpu_custom_call.1} parent=1 // pred_check_branch
      %343 = sbr.rel (0) target = $region33
    $region32: #{tpu_custom_call.1} parent=1 // pred_region
      %345 = vsyncadd [#allocation4], 0
      %s347 = sshll.u32 [#allocation3], 4
      %s348 = int_to_ptr.vmem [resolvable:$true] %s347
      %s349 = sshll.u32 %s7, 4
      %s350 = int_to_ptr.hbm [resolvable:$true] %s349
      %352 = dma.vmem_to_hbm [thread:$0]  %s348, 16, %s350, [#allocation4]
    $region33: #{tpu_custom_call.1} parent=1 // pred_fallthru
      _
    // Predicated region
    $region34: #{tpu_custom_call.1} parent=1 // pred_check
      _
    $region35: #{tpu_custom_call.1} parent=1 // pred_check_branch
      %354 = sbr.rel (0) target = $region37
    $region36: #{tpu_custom_call.1} parent=1 // pred_region
      %356 = dma.done [#allocation4], 16
    $region37: #{tpu_custom_call.1} parent=1 // pred_fallthru
      _
    %357 = vsyncpa [#allocation4], 1

</llo_original>
